<compile_context>
chip_gen: v5e
topology: v5e:2x2
jax: 0.10.0
libtpu: 0.0.40
codegen_flags: <defaults>
</compile_context>

<pallas_src>
import functools

import jax
import jax.numpy as jnp
from jax.experimental import pallas as pl
from jax.experimental.pallas import tpu as pltpu

_VMEM_LIMIT = 48 * 1024 * 1024  # < v7x 64 MiB physical VMEM


# ----------------------------- helpers --------------------------------------


def _round_up(x, m):
    return (x + m - 1) // m * m


def _pad2(x, rows, cols):
    return jnp.pad(x, ((0, rows - x.shape[0]), (0, cols - x.shape[1])))


def _choose_tiles(n):
    """(n_pad, tm, tk): tm | n_pad, tk | n_pad, all multiples of 128."""
    n128 = _round_up(n, 128)
    if n128 <= 1024:
        n_pad = n128
        tk = n_pad
        # keep >= 2 row blocks when possible so the "parallel" axis can span
        # both v7x TensorCores; tiny graphs fit in one tile anyway.
        tm = 128 if n_pad >= 256 else n_pad
    else:
        n_pad = _round_up(n, 1024)
        tm = 1024
        tk = 2048 if n_pad % 2048 == 0 else 1024
    return n_pad, tm, tk


def adjacency_int8_and_dinv(edge_index, num_nodes):
    """Raw A_hat (adjacency + remaining self loops) as int8, and D^{-1/2} f32[N].

    Built directly in the streaming dtype (int8) so no dense f32/int32 N x N
    intermediate is materialized.  Duplicate edges accumulate (matches PyG);
    self loops are only added to nodes lacking one (add_remaining_self_loops).
    """
    row, col = edge_index[0], edge_index[1]
    a = jnp.zeros((num_nodes, num_nodes), jnp.int8)
    a = a.at[row, col].add(jnp.ones(row.shape, jnp.int8))
    diag = jnp.arange(num_nodes)
    d = a[diag, diag]
    a = a.at[diag, diag].set(jnp.where(d > 0, d, jnp.int8(1)).astype(jnp.int8))
    deg = jnp.sum(a, axis=1, dtype=jnp.int32).astype(jnp.float32)
    dinv = jnp.where(deg > 0.0, jax.lax.rsqrt(deg), 0.0)
    return a, dinv


# ----------------------------- kernels --------------------------------------


def _gcn1_kernel(a_ref, z_ref, dinv_ref, b1_ref, w2_ref, hw2_ref, acc_ref, *, tk):
    # acc += A_hat[i, k] @ Z1s[k]     (Z1s = D^{-1/2} X W1, resident in VMEM)
    # finalize: H = relu(dinv_i * acc + b1);  HW2s = dinv_i * (H @ W2)
    k = pl.program_id(1)

    @pl.when(k == 0)
    def _():
        acc_ref[...] = jnp.zeros_like(acc_ref)

    off = pl.multiple_of(k * tk, 128)
    z_blk = z_ref[pl.ds(off, tk), :]
    acc_ref[...] += jnp.dot(
        a_ref[...].astype(z_blk.dtype), z_blk, preferred_element_type=jnp.float32
    )

    @pl.when(k == pl.num_programs(1) - 1)
    def _():
        dinv_i = dinv_ref[...]  # (tm, 1) f32
        h = jnp.maximum(acc_ref[...] * dinv_i + b1_ref[...], 0.0)
        # Dropout(p=0.1) is identity in eval mode.
        hw2 = jnp.dot(
            h.astype(w2_ref.dtype), w2_ref[...], preferred_element_type=jnp.float32
        )
        hw2_ref[...] = (hw2 * dinv_i).astype(hw2_ref.dtype)


def _gcn2_kernel(a_ref, hw2_ref, dinv_ref, b2_ref, out_ref, acc_ref, *, tk):
    # acc += A_hat[i, k] @ HW2s[k]    (HW2s resident in VMEM)
    # finalize: out = dinv_i * acc + b2
    k = pl.program_id(1)

    @pl.when(k == 0)
    def _():
        acc_ref[...] = jnp.zeros_like(acc_ref)

    off = pl.multiple_of(k * tk, 128)
    h_blk = hw2_ref[pl.ds(off, tk), :]
    acc_ref[...] += jnp.dot(
        a_ref[...].astype(h_blk.dtype), h_blk, preferred_element_type=jnp.float32
    )

    @pl.when(k == pl.num_programs(1) - 1)
    def _():
        out_ref[...] = (acc_ref[...] * dinv_ref[...] + b2_ref[...]).astype(
            out_ref.dtype
        )


# --------------------------- forward wrapper ---------------------------------


@functools.partial(jax.jit, static_argnames=("num_nodes",))
def _rna_encoder_impl(x, edge_index, w1, b1, w2, b2, *, num_nodes):
    n = num_nodes
    in_c, hid = w1.shape
    lat = w2.shape[1]
    c1_p = _round_up(hid, 128)
    c2_p = _round_up(lat, 128)

    n_pad, tm, tk = _choose_tiles(n)
    num_i, num_k = n_pad // tm, n_pad // tk
    bf = jnp.bfloat16

    # Raw int8 adjacency + folded normalization vector.
    a_hat, dinv = adjacency_int8_and_dinv(edge_index, n)
    a_p = _pad2(a_hat, n_pad, n_pad)                              # int8
    dinv_p = jnp.pad(dinv, (0, n_pad - n)).reshape(n_pad, 1)      # f32

    # Z1s = D^{-1/2} (X @ W1): tiny plain-XLA dot (no separate pallas_call).
    z1s_p = _pad2((dinv[:, None] * (x @ w1)).astype(bf), n_pad, c1_p)
    w2_p = _pad2(w2, c1_p, c2_p).astype(bf)
    b1_p = jnp.pad(b1, (0, c1_p - hid)).reshape(1, c1_p).astype(jnp.float32)
    b2_p = jnp.pad(b2, (0, c2_p - lat)).reshape(1, c2_p).astype(jnp.float32)

    sem = ("parallel", "arbitrary")

    # --- Layer 1 fused with ReLU and the layer-2 input projection ------------
    #     HW2s = D^{-1/2} (relu(D^{-1/2} (A_hat @ Z1s) + b1) @ W2)
    hw2s = pl.pallas_call(
        functools.partial(_gcn1_kernel, tk=tk),
        out_shape=jax.ShapeDtypeStruct((n_pad, c2_p), bf),
        grid_spec=pltpu.PrefetchScalarGridSpec(
            num_scalar_prefetch=0,
            grid=(num_i, num_k),
            in_specs=[
                pl.BlockSpec((tm, tk), lambda i, k: (i, k)),        # A (int8)
                pl.BlockSpec((n_pad, c1_p), lambda i, k: (0, 0)),   # Z1s resident
                pl.BlockSpec((tm, 1), lambda i, k: (i, 0)),         # dinv rows
                pl.BlockSpec((1, c1_p), lambda i, k: (0, 0)),       # b1
                pl.BlockSpec((c1_p, c2_p), lambda i, k: (0, 0)),    # W2 resident
            ],
            out_specs=pl.BlockSpec((tm, c2_p), lambda i, k: (i, 0)),
            scratch_shapes=[pltpu.VMEM((tm, c1_p), jnp.float32)],
        ),
        compiler_params=pltpu.CompilerParams(
            dimension_semantics=sem, vmem_limit_bytes=_VMEM_LIMIT
        ),
        cost_estimate=pl.CostEstimate(
            flops=2 * n_pad * n_pad * c1_p + 2 * n_pad * c1_p * c2_p,
            transcendentals=0,
            bytes_accessed=n_pad * n_pad
            + 2 * n_pad * c1_p
            + 4 * n_pad
            + 2 * c1_p * c2_p
            + 2 * n_pad * c2_p,
        ),
    )(a_p, z1s_p, dinv_p, b1_p, w2_p)

    # --- Layer 2: out = D^{-1/2} (A_hat @ HW2s) + b2 --------------------------
    out_p = pl.pallas_call(
        functools.partial(_gcn2_kernel, tk=tk),
        out_shape=jax.ShapeDtypeStruct((n_pad, c2_p), jnp.float32),
        grid_spec=pltpu.PrefetchScalarGridSpec(
            num_scalar_prefetch=0,
            grid=(num_i, num_k),
            in_specs=[
                pl.BlockSpec((tm, tk), lambda i, k: (i, k)),        # A (int8)
                pl.BlockSpec((n_pad, c2_p), lambda i, k: (0, 0)),   # HW2s resident
                pl.BlockSpec((tm, 1), lambda i, k: (i, 0)),         # dinv rows
                pl.BlockSpec((1, c2_p), lambda i, k: (0, 0)),       # b2
            ],
            out_specs=pl.BlockSpec((tm, c2_p), lambda i, k: (i, 0)),
            scratch_shapes=[pltpu.VMEM((tm, c2_p), jnp.float32)],
        ),
        compiler_params=pltpu.CompilerParams(
            dimension_semantics=sem, vmem_limit_bytes=_VMEM_LIMIT
        ),
        cost_estimate=pl.CostEstimate(
            flops=2 * n_pad * n_pad * c2_p,
            transcendentals=0,
            bytes_accessed=n_pad * n_pad
            + 2 * n_pad * c2_p
            + 4 * n_pad
            + 4 * n_pad * c2_p,
        ),
    )(a_p, hw2s, dinv_p, b2_p)

    return out_p[:n, :lat]


def rna_encoder_forward(x, edge_index, params):
    return _rna_encoder_impl(
        x,
        edge_index,
        params["w1"],
        params["b1"],
        params["w2"],
        params["b2"],
        num_nodes=x.shape[0],
    )


# ---------------------------- params / references -----------------------------


def _glorot(key, shape):
    fan_in, fan_out = shape
    limit = jnp.sqrt(6.0 / (fan_in + fan_out))
    return jax.random.uniform(key, shape, jnp.float32, -limit, limit)


def init_params(key, in_channels, hidden_channels, latent_dim):
    k1, k2 = jax.random.split(key)
    return {
        "w1": _glorot(k1, (in_channels, hidden_channels)),
        "b1": jnp.zeros((hidden_channels,), jnp.float32),
        "w2": _glorot(k2, (hidden_channels, latent_dim)),
        "b2": jnp.zeros((latent_dim,), jnp.float32),
    }


def reference_forward_f32(x, edge_index, params):
    """Pure-JAX f32 reference (eval mode)."""
    a_hat, dinv = adjacency_int8_and_dinv(edge_index, x.shape[0])
    a = dinv[:, None] * a_hat.astype(jnp.float32) * dinv[None, :]
    h = jnp.maximum(a @ (x @ params["w1"]) + params["b1"], 0.0)
    return a @ (h @ params["w2"]) + params["b2"]


def reference_forward_mirrored(x, edge_index, params):
    """Pure-JAX reference mirroring the kernel's int8/bf16/f32 mixed precision."""
    bf = jnp.bfloat16
    a_hat, dinv = adjacency_int8_and_dinv(edge_index, x.shape[0])
    a = a_hat.astype(bf)
    z1s = (dinv[:, None] * (x @ params["w1"])).astype(bf)
    h = jnp.maximum(
        dinv[:, None] * jnp.dot(a, z1s, preferred_element_type=jnp.float32)
        + params["b1"],
        0.0,
    )
    hw2s = (
        dinv[:, None]
        * jnp.dot(
            h.astype(bf), params["w2"].astype(bf), preferred_element_type=jnp.float32
        )
    ).astype(bf)
    return (
        dinv[:, None] * jnp.dot(a, hw2s, preferred_element_type=jnp.float32)
        + params["b2"]
    )


# --------------------------------- main ---------------------------------------

if __name__ == "__main__":
    # Small, deterministic example: 8 nodes, in_channels=4, hidden=32, latent=16.
    N, IN_C, HID_C, LAT = 8, 4, 32, 16
    key = jax.random.PRNGKey(0)
    kx, kp = jax.random.split(key)

    x = jax.random.normal(kx, (N, IN_C), jnp.float32)

    # Deterministic ring graph (both directions), like an undirected edge_index.
    src = jnp.arange(N)
    dst = (src + 1) % N
    edge_index = jnp.stack(
        [jnp.concatenate([src, dst]), jnp.concatenate([dst, src])], axis=0
    ).astype(jnp.int32)

    params = init_params(kp, IN_C, HID_C, LAT)

    out = jax.block_until_ready(rna_encoder_forward(x, edge_index, params))

    ref_mixed = reference_forward_mirrored(x, edge_index, params)
    ref_f32 = reference_forward_f32(x, edge_index, params)

    assert out.shape == (N, LAT)
    assert jnp.allclose(out, ref_mixed, atol=2e-3, rtol=2e-3), (
        float(jnp.max(jnp.abs(out - ref_mixed)))
    )
    assert jnp.allclose(out, ref_f32, atol=5e-2, rtol=5e-2), (
        float(jnp.max(jnp.abs(out - ref_f32)))
    )
    print("KERNEL_OK")
</pallas_src>

<mosaic_0001>
module attributes {stable_mosaic.version = 11 : i64} {
  func.func @_gcn1_kernel(%arg0: i32, %arg1: i32, %arg2: memref<128x128xi8, #tpu.memory_space<vmem>>, %arg3: memref<128x128xbf16, #tpu.memory_space<vmem>>, %arg4: memref<128x1xf32, #tpu.memory_space<vmem>>, %arg5: memref<1x128xf32, #tpu.memory_space<vmem>>, %arg6: memref<128x128xbf16, #tpu.memory_space<vmem>>, %arg7: memref<128x128xbf16, #tpu.memory_space<vmem>>, %arg8: memref<128x128xf32, #tpu.memory_space<vmem>>) attributes {dimension_semantics = [#tpu.dimension_semantics<parallel>, #tpu.dimension_semantics<arbitrary>], iteration_bounds = array<i64: 1, 1>, scalar_prefetch = 0 : i64, scratch_operands = 1 : i64, tpu.core_type = #tpu.core_type<tc>, window_params = [{transform_indices = @transform_0, window_bounds = array<i64: 128, 128>}, {pipeline_mode = #tpu.pipeline_mode<synchronous>, transform_indices = @transform_1, window_bounds = array<i64: 128, 128>}, {transform_indices = @transform_2, window_bounds = array<i64: 128, 1>}, {pipeline_mode = #tpu.pipeline_mode<synchronous>, transform_indices = @transform_3, window_bounds = array<i64: 1, 128>}, {pipeline_mode = #tpu.pipeline_mode<synchronous>, transform_indices = @transform_4, window_bounds = array<i64: 128, 128>}, {transform_indices = @transform_5, window_bounds = array<i64: 128, 128>}]} {
    %c0_i32 = arith.constant 0 : i32
    %0 = arith.cmpi eq, %arg1, %c0_i32 : i32
    %1 = arith.extui %0 : i1 to i32
    %c0_i32_0 = arith.constant 0 : i32
    %2 = arith.cmpi ne, %1, %c0_i32_0 : i32
    scf.if %2 {
      %cst_9 = arith.constant 0.000000e+00 : f32
      %16 = vector.broadcast %cst_9 : f32 to vector<128x128xf32>
      %c0_10 = arith.constant 0 : index
      %c0_11 = arith.constant 0 : index
      %17 = vector.load %arg8[%c0_10, %c0_11] : memref<128x128xf32, #tpu.memory_space<vmem>>, vector<128x128xf32>
      tpu.vector_store %arg8[%c0_10, %c0_11], %16 {strides = array<i32>} : memref<128x128xf32, #tpu.memory_space<vmem>>, vector<128x128xf32>,
    } else {
    }
    %c128_i32 = arith.constant 128 : i32
    %3 = arith.muli %arg1, %c128_i32 : i32
    %4 = tpu.assume_multiple %3, 128 : i32
    %5 = arith.index_cast %4 : i32 to index
    %c0 = arith.constant 0 : index
    %6 = vector.load %arg3[%5, %c0] : memref<128x128xbf16, #tpu.memory_space<vmem>>, vector<128x128xbf16>
    %c0_1 = arith.constant 0 : index
    %c0_2 = arith.constant 0 : index
    %7 = vector.load %arg8[%c0_1, %c0_2] : memref<128x128xf32, #tpu.memory_space<vmem>>, vector<128x128xf32>
    %c0_3 = arith.constant 0 : index
    %c0_4 = arith.constant 0 : index
    %8 = vector.load %arg2[%c0_3, %c0_4] : memref<128x128xi8, #tpu.memory_space<vmem>>, vector<128x128xi8>
    %9 = arith.sitofp %8 : vector<128x128xi8> to vector<128x128xbf16>
    %cst = arith.constant dense<0.000000e+00> : vector<128x128xf32>
    %10 = tpu.matmul %9, %6, %cst {dimension_numbers = #tpu.dot_dimension_numbers<[1], [0], [0], [1], [0, 0, 1, 1], [], []>} : vector<128x128xbf16>, vector<128x128xbf16>, vector<128x128xf32> -> vector<128x128xf32>
    %11 = arith.addf %7, %10 : vector<128x128xf32>
    %c0_5 = arith.constant 0 : index
    %c0_6 = arith.constant 0 : index
    %12 = vector.load %arg8[%c0_5, %c0_6] : memref<128x128xf32, #tpu.memory_space<vmem>>, vector<128x128xf32>
    tpu.vector_store %arg8[%c0_5, %c0_6], %11 {strides = array<i32>} : memref<128x128xf32, #tpu.memory_space<vmem>>, vector<128x128xf32>,
    %c0_i32_7 = arith.constant 0 : i32
    %13 = arith.cmpi eq, %arg1, %c0_i32_7 : i32
    %14 = arith.extui %13 : i1 to i32
    %c0_i32_8 = arith.constant 0 : i32
    %15 = arith.cmpi ne, %14, %c0_i32_8 : i32
    scf.if %15 {
      %c0_9 = arith.constant 0 : index
      %c0_10 = arith.constant 0 : index
      %16 = vector.load %arg4[%c0_9, %c0_10] : memref<128x1xf32, #tpu.memory_space<vmem>>, vector<128x1xf32>
      %c0_11 = arith.constant 0 : index
      %c0_12 = arith.constant 0 : index
      %17 = vector.load %arg8[%c0_11, %c0_12] : memref<128x128xf32, #tpu.memory_space<vmem>>, vector<128x128xf32>
      %18 = vector.broadcast %16 : vector<128x1xf32> to vector<128x128xf32>
      %19 = arith.mulf %17, %18 : vector<128x128xf32>
      %c0_13 = arith.constant 0 : index
      %c0_14 = arith.constant 0 : index
      %20 = vector.load %arg5[%c0_13, %c0_14] : memref<1x128xf32, #tpu.memory_space<vmem>>, vector<1x128xf32>
      %21 = vector.broadcast %20 : vector<1x128xf32> to vector<128x128xf32>
      %22 = arith.addf %19, %21 : vector<128x128xf32>
      %cst_15 = arith.constant 0.000000e+00 : f32
      %23 = vector.broadcast %cst_15 : f32 to vector<128x128xf32>
      %24 = arith.maximumf %22, %23 : vector<128x128xf32>
      %25 = arith.truncf %24 : vector<128x128xf32> to vector<128x128xbf16>
      %c0_16 = arith.constant 0 : index
      %c0_17 = arith.constant 0 : index
      %26 = vector.load %arg6[%c0_16, %c0_17] : memref<128x128xbf16, #tpu.memory_space<vmem>>, vector<128x128xbf16>
      %cst_18 = arith.constant dense<0.000000e+00> : vector<128x128xf32>
      %27 = tpu.matmul %25, %26, %cst_18 {dimension_numbers = #tpu.dot_dimension_numbers<[1], [0], [0], [1], [0, 0, 1, 1], [], []>} : vector<128x128xbf16>, vector<128x128xbf16>, vector<128x128xf32> -> vector<128x128xf32>
      %28 = vector.broadcast %16 : vector<128x1xf32> to vector<128x128xf32>
      %29 = arith.mulf %27, %28 : vector<128x128xf32>
      %30 = arith.truncf %29 : vector<128x128xf32> to vector<128x128xbf16>
      %c0_19 = arith.constant 0 : index
      %c0_20 = arith.constant 0 : index
      %31 = vector.load %arg7[%c0_19, %c0_20] : memref<128x128xbf16, #tpu.memory_space<vmem>>, vector<128x128xbf16>
      tpu.vector_store %arg7[%c0_19, %c0_20], %30 {strides = array<i32>} : memref<128x128xbf16, #tpu.memory_space<vmem>>, vector<128x128xbf16>,
    } else {
    }
    return
  }
  func.func @transform_0(%arg0: i32, %arg1: i32) -> (i32, i32) {
    %c0_i32 = arith.constant 0 : i32
    return %arg0, %arg1 : i32, i32
  }
  func.func @transform_1(%arg0: i32, %arg1: i32) -> (i32, i32) {
    %c0_i32 = arith.constant 0 : i32
    %c0_i32_0 = arith.constant 0 : i32
    %c0_i32_1 = arith.constant 0 : i32
    return %c0_i32, %c0_i32_0 : i32, i32
  }
  func.func @transform_2(%arg0: i32, %arg1: i32) -> (i32, i32) {
    %c0_i32 = arith.constant 0 : i32
    %c0_i32_0 = arith.constant 0 : i32
    return %arg0, %c0_i32 : i32, i32
  }
  func.func @transform_3(%arg0: i32, %arg1: i32) -> (i32, i32) {
    %c0_i32 = arith.constant 0 : i32
    %c0_i32_0 = arith.constant 0 : i32
    %c0_i32_1 = arith.constant 0 : i32
    return %c0_i32, %c0_i32_0 : i32, i32
  }
  func.func @transform_4(%arg0: i32, %arg1: i32) -> (i32, i32) {
    %c0_i32 = arith.constant 0 : i32
    %c0_i32_0 = arith.constant 0 : i32
    %c0_i32_1 = arith.constant 0 : i32
    return %c0_i32, %c0_i32_0 : i32, i32
  }
  func.func @transform_5(%arg0: i32, %arg1: i32) -> (i32, i32) {
    %c0_i32 = arith.constant 0 : i32
    %c0_i32_0 = arith.constant 0 : i32
    return %arg0, %c0_i32 : i32, i32
  }
}

module attributes {stable_mosaic.version = 11 : i64} {
  func.func @_gcn2_kernel(%arg0: i32, %arg1: i32, %arg2: memref<128x128xi8, #tpu.memory_space<vmem>>, %arg3: memref<128x128xbf16, #tpu.memory_space<vmem>>, %arg4: memref<128x1xf32, #tpu.memory_space<vmem>>, %arg5: memref<1x128xf32, #tpu.memory_space<vmem>>, %arg6: memref<128x128xf32, #tpu.memory_space<vmem>>, %arg7: memref<128x128xf32, #tpu.memory_space<vmem>>) attributes {dimension_semantics = [#tpu.dimension_semantics<parallel>, #tpu.dimension_semantics<arbitrary>], iteration_bounds = array<i64: 1, 1>, scalar_prefetch = 0 : i64, scratch_operands = 1 : i64, tpu.core_type = #tpu.core_type<tc>, window_params = [{transform_indices = @transform_0, window_bounds = array<i64: 128, 128>}, {pipeline_mode = #tpu.pipeline_mode<synchronous>, transform_indices = @transform_1, window_bounds = array<i64: 128, 128>}, {transform_indices = @transform_2, window_bounds = array<i64: 128, 1>}, {pipeline_mode = #tpu.pipeline_mode<synchronous>, transform_indices = @transform_3, window_bounds = array<i64: 1, 128>}, {transform_indices = @transform_4, window_bounds = array<i64: 128, 128>}]} {
    %c0_i32 = arith.constant 0 : i32
    %0 = arith.cmpi eq, %arg1, %c0_i32 : i32
    %1 = arith.extui %0 : i1 to i32
    %c0_i32_0 = arith.constant 0 : i32
    %2 = arith.cmpi ne, %1, %c0_i32_0 : i32
    scf.if %2 {
      %cst_9 = arith.constant 0.000000e+00 : f32
      %16 = vector.broadcast %cst_9 : f32 to vector<128x128xf32>
      %c0_10 = arith.constant 0 : index
      %c0_11 = arith.constant 0 : index
      %17 = vector.load %arg7[%c0_10, %c0_11] : memref<128x128xf32, #tpu.memory_space<vmem>>, vector<128x128xf32>
      tpu.vector_store %arg7[%c0_10, %c0_11], %16 {strides = array<i32>} : memref<128x128xf32, #tpu.memory_space<vmem>>, vector<128x128xf32>,
    } else {
    }
    %c128_i32 = arith.constant 128 : i32
    %3 = arith.muli %arg1, %c128_i32 : i32
    %4 = tpu.assume_multiple %3, 128 : i32
    %5 = arith.index_cast %4 : i32 to index
    %c0 = arith.constant 0 : index
    %6 = vector.load %arg3[%5, %c0] : memref<128x128xbf16, #tpu.memory_space<vmem>>, vector<128x128xbf16>
    %c0_1 = arith.constant 0 : index
    %c0_2 = arith.constant 0 : index
    %7 = vector.load %arg7[%c0_1, %c0_2] : memref<128x128xf32, #tpu.memory_space<vmem>>, vector<128x128xf32>
    %c0_3 = arith.constant 0 : index
    %c0_4 = arith.constant 0 : index
    %8 = vector.load %arg2[%c0_3, %c0_4] : memref<128x128xi8, #tpu.memory_space<vmem>>, vector<128x128xi8>
    %9 = arith.sitofp %8 : vector<128x128xi8> to vector<128x128xbf16>
    %cst = arith.constant dense<0.000000e+00> : vector<128x128xf32>
    %10 = tpu.matmul %9, %6, %cst {dimension_numbers = #tpu.dot_dimension_numbers<[1], [0], [0], [1], [0, 0, 1, 1], [], []>} : vector<128x128xbf16>, vector<128x128xbf16>, vector<128x128xf32> -> vector<128x128xf32>
    %11 = arith.addf %7, %10 : vector<128x128xf32>
    %c0_5 = arith.constant 0 : index
    %c0_6 = arith.constant 0 : index
    %12 = vector.load %arg7[%c0_5, %c0_6] : memref<128x128xf32, #tpu.memory_space<vmem>>, vector<128x128xf32>
    tpu.vector_store %arg7[%c0_5, %c0_6], %11 {strides = array<i32>} : memref<128x128xf32, #tpu.memory_space<vmem>>, vector<128x128xf32>,
    %c0_i32_7 = arith.constant 0 : i32
    %13 = arith.cmpi eq, %arg1, %c0_i32_7 : i32
    %14 = arith.extui %13 : i1 to i32
    %c0_i32_8 = arith.constant 0 : i32
    %15 = arith.cmpi ne, %14, %c0_i32_8 : i32
    scf.if %15 {
      %c0_9 = arith.constant 0 : index
      %c0_10 = arith.constant 0 : index
      %16 = vector.load %arg7[%c0_9, %c0_10] : memref<128x128xf32, #tpu.memory_space<vmem>>, vector<128x128xf32>
      %c0_11 = arith.constant 0 : index
      %c0_12 = arith.constant 0 : index
      %17 = vector.load %arg4[%c0_11, %c0_12] : memref<128x1xf32, #tpu.memory_space<vmem>>, vector<128x1xf32>
      %18 = vector.broadcast %17 : vector<128x1xf32> to vector<128x128xf32>
      %19 = arith.mulf %16, %18 : vector<128x128xf32>
      %c0_13 = arith.constant 0 : index
      %c0_14 = arith.constant 0 : index
      %20 = vector.load %arg5[%c0_13, %c0_14] : memref<1x128xf32, #tpu.memory_space<vmem>>, vector<1x128xf32>
      %21 = vector.broadcast %20 : vector<1x128xf32> to vector<128x128xf32>
      %22 = arith.addf %19, %21 : vector<128x128xf32>
      %c0_15 = arith.constant 0 : index
      %c0_16 = arith.constant 0 : index
      %23 = vector.load %arg6[%c0_15, %c0_16] : memref<128x128xf32, #tpu.memory_space<vmem>>, vector<128x128xf32>
      tpu.vector_store %arg6[%c0_15, %c0_16], %22 {strides = array<i32>} : memref<128x128xf32, #tpu.memory_space<vmem>>, vector<128x128xf32>,
    } else {
    }
    return
  }
  func.func @transform_0(%arg0: i32, %arg1: i32) -> (i32, i32) {
    %c0_i32 = arith.constant 0 : i32
    return %arg0, %arg1 : i32, i32
  }
  func.func @transform_1(%arg0: i32, %arg1: i32) -> (i32, i32) {
    %c0_i32 = arith.constant 0 : i32
    %c0_i32_0 = arith.constant 0 : i32
    %c0_i32_1 = arith.constant 0 : i32
    return %c0_i32, %c0_i32_0 : i32, i32
  }
  func.func @transform_2(%arg0: i32, %arg1: i32) -> (i32, i32) {
    %c0_i32 = arith.constant 0 : i32
    %c0_i32_0 = arith.constant 0 : i32
    return %arg0, %c0_i32 : i32, i32
  }
  func.func @transform_3(%arg0: i32, %arg1: i32) -> (i32, i32) {
    %c0_i32 = arith.constant 0 : i32
    %c0_i32_0 = arith.constant 0 : i32
    %c0_i32_1 = arith.constant 0 : i32
    return %c0_i32, %c0_i32_0 : i32, i32
  }
  func.func @transform_4(%arg0: i32, %arg1: i32) -> (i32, i32) {
    %c0_i32 = arith.constant 0 : i32
    %c0_i32_0 = arith.constant 0 : i32
    return %arg0, %c0_i32 : i32, i32
  }
}

</mosaic_0001>

<llo_original>
// kernel: _rna_encoder_impl.2
$region0: #{_rna_encoder_impl.2}
  #allocation0 [shape = 'u32[]', space=smem, size = 0x4, offset = 0x4, fixed_abs, tag = 'smem constant byte address 0x4 - core index']
  #allocation1 [shape = 'u32[72,128]{1,0:T(1,128)}', space=vmem, size = 0x9000, scoped, tag = 'internal scratch']
  #allocation2 [shape = 'f32[128,128]{1,0:T(8,128)}', space=vmem, size = 0x10000, scoped, tag = 'scratch operand']
  %s0 = inlined_call_operand.vmem [shape: s8[128,128], index: 0, kind: input, shape index: {}]
  %s1 = inlined_call_operand.vmem [shape: bf16[128,128], index: 1, kind: input, shape index: {}]
  %s2 = inlined_call_operand.vmem [shape: f32[128,1], index: 2, kind: input, shape index: {}]
  %s3 = inlined_call_operand.vmem [shape: f32[1,128], index: 3, kind: input, shape index: {}]
  %s4 = inlined_call_operand.vmem [shape: bf16[128,128], index: 4, kind: input, shape index: {}]
  %s5 = inlined_call_operand.vmem [shape: bf16[128,128], index: 5, kind: output, shape index: {}]
  %s6 = sld [smem:[#allocation0]]
  $region38: #{_rna_encoder_impl.2} parent=0
    _
  %s8 = ssub.s32 1, %s6
  %s9 = scalar_select 0, %s8, %s6
  // Predicated region
  $region2: #{_rna_encoder_impl.2} parent=0 // pred_check
    _
  $region3: #{_rna_encoder_impl.2} parent=0 // pred_check_branch
    %11 = sbr.rel (0) target = $region5
  $region4: #{_rna_encoder_impl.2} parent=0 // pred_region
    _
  $region5: #{_rna_encoder_impl.2} parent=0 // pred_fallthru
    _
  // Predicated region
  $region6: #{_rna_encoder_impl.2} parent=0 // pred_check
    _
  $region7: #{_rna_encoder_impl.2} parent=0 // pred_check_branch
    %13 = sbr.rel (0) target = $region9
  $region8: #{_rna_encoder_impl.2} parent=0 // pred_region
    _
  $region9: #{_rna_encoder_impl.2} parent=0 // pred_fallthru
    _
  // Predicated region
  $region10: #{_rna_encoder_impl.2} parent=0 // pred_check
    _
  $region11: #{_rna_encoder_impl.2} parent=0 // pred_check_branch
    %15 = sbr.rel (0) target = $region13
  $region12: #{_rna_encoder_impl.2} parent=0 // pred_region
    _
  $region13: #{_rna_encoder_impl.2} parent=0 // pred_fallthru
    _
  // Predicated region
  $region14: #{_rna_encoder_impl.2} parent=0 // pred_check
    _
  $region15: #{_rna_encoder_impl.2} parent=0 // pred_check_branch
    %17 = sbr.rel (0) target = $region17
  $region16: #{_rna_encoder_impl.2} parent=0 // pred_region
    _
  $region17: #{_rna_encoder_impl.2} parent=0 // pred_fallthru
    _
  // Predicated region
  $region18: #{_rna_encoder_impl.2} parent=0 // pred_check
    _
  $region19: #{_rna_encoder_impl.2} parent=0 // pred_check_branch
    %19 = sbr.rel (0) target = $region21
  $region20: #{_rna_encoder_impl.2} parent=0 // pred_region
    _
  $region21: #{_rna_encoder_impl.2} parent=0 // pred_fallthru
    _
  %p20 = scmp.eq.s32.totalorder 0, 0
  // Predicated region
  $region22: #{_rna_encoder_impl.2} parent=0 // pred_check
    %p21 = pneg %p20
  $region23: #{_rna_encoder_impl.2} parent=0 // pred_check_branch
    %23 = sbr.rel (%p21) target = $region25
  $region24: #{_rna_encoder_impl.2} parent=0 // pred_region
    %24 = vst [vmem:[#allocation2] sm:$0xff] 0.0
    %25 = vst [vmem:[#allocation2 + $0x8] sm:$0xff] 0.0
    %26 = vst [vmem:[#allocation2 + $0x10] sm:$0xff] 0.0
    %27 = vst [vmem:[#allocation2 + $0x18] sm:$0xff] 0.0
    %28 = vst [vmem:[#allocation2 + $0x20] sm:$0xff] 0.0
    %29 = vst [vmem:[#allocation2 + $0x28] sm:$0xff] 0.0
    %30 = vst [vmem:[#allocation2 + $0x30] sm:$0xff] 0.0
    %31 = vst [vmem:[#allocation2 + $0x38] sm:$0xff] 0.0
    %32 = vst [vmem:[#allocation2 + $0x40] sm:$0xff] 0.0
    %33 = vst [vmem:[#allocation2 + $0x48] sm:$0xff] 0.0
    %34 = vst [vmem:[#allocation2 + $0x50] sm:$0xff] 0.0
    %35 = vst [vmem:[#allocation2 + $0x58] sm:$0xff] 0.0
    %36 = vst [vmem:[#allocation2 + $0x60] sm:$0xff] 0.0
    %37 = vst [vmem:[#allocation2 + $0x68] sm:$0xff] 0.0
    %38 = vst [vmem:[#allocation2 + $0x70] sm:$0xff] 0.0
    %39 = vst [vmem:[#allocation2 + $0x78] sm:$0xff] 0.0
  $region25: #{_rna_encoder_impl.2} parent=0 // pred_fallthru
    _
  %s40 = smul.u32 0, 128
  %s41 = sshra.s32 %s40, 3
  %s42 = sand.u32 %s40, 7
  %s43 = smul.addr %s41, 4
  %s44 = scalar_lea.vmem %s1, %s43
  %v45 = vld [vmem:[%s44] sm:$0xf]
  %v46 = vld [vmem:[%s44 + $0x4] sm:$0xf]
  %v47 = vld [vmem:[%s44 + $0x8] sm:$0xf]
  %v48 = vld [vmem:[%s44 + $0xc] sm:$0xf]
  %v49 = vld [vmem:[%s44 + $0x10] sm:$0xf]
  %v50 = vld [vmem:[%s44 + $0x14] sm:$0xf]
  %v51 = vld [vmem:[%s44 + $0x18] sm:$0xf]
  %v52 = vld [vmem:[%s44 + $0x1c] sm:$0xf]
  %v53 = vld [vmem:[%s44 + $0x20] sm:$0xf]
  %v54 = vld [vmem:[%s44 + $0x24] sm:$0xf]
  %v55 = vld [vmem:[%s44 + $0x28] sm:$0xf]
  %v56 = vld [vmem:[%s44 + $0x2c] sm:$0xf]
  %v57 = vld [vmem:[%s44 + $0x30] sm:$0xf]
  %v58 = vld [vmem:[%s44 + $0x34] sm:$0xf]
  %v59 = vld [vmem:[%s44 + $0x38] sm:$0xf]
  %v60 = vld [vmem:[%s44 + $0x3c] sm:$0xf]
  %v61 = vld [vmem:[#allocation2] sm:$0xff]
  %v62 = vld [vmem:[#allocation2 + $0x8] sm:$0xff]
  %v63 = vld [vmem:[#allocation2 + $0x10] sm:$0xff]
  %v64 = vld [vmem:[#allocation2 + $0x18] sm:$0xff]
  %v65 = vld [vmem:[#allocation2 + $0x20] sm:$0xff]
  %v66 = vld [vmem:[#allocation2 + $0x28] sm:$0xff]
  %v67 = vld [vmem:[#allocation2 + $0x30] sm:$0xff]
  %v68 = vld [vmem:[#allocation2 + $0x38] sm:$0xff]
  %v69 = vld [vmem:[#allocation2 + $0x40] sm:$0xff]
  %v70 = vld [vmem:[#allocation2 + $0x48] sm:$0xff]
  %v71 = vld [vmem:[#allocation2 + $0x50] sm:$0xff]
  %v72 = vld [vmem:[#allocation2 + $0x58] sm:$0xff]
  %v73 = vld [vmem:[#allocation2 + $0x60] sm:$0xff]
  %v74 = vld [vmem:[#allocation2 + $0x68] sm:$0xff]
  %v75 = vld [vmem:[#allocation2 + $0x70] sm:$0xff]
  %v76 = vld [vmem:[#allocation2 + $0x78] sm:$0xff]
  %v77 = vld [vmem:[%s0] sm:$0xff]
  %v78 = vld [vmem:[%s0 + $0x8] sm:$0xff]
  %v79 = vld [vmem:[%s0 + $0x10] sm:$0xff]
  %v80 = vld [vmem:[%s0 + $0x18] sm:$0xff]
  %v81 = vunpack.c.0.s8 %v77
  %v82 = vunpack.c.1.s8 %v77
  %v83 = vunpack.c.2.s8 %v77
  %v84 = vunpack.c.3.s8 %v77
  %v85 = vunpack.c.0.s8 %v78
  %v86 = vunpack.c.1.s8 %v78
  %v87 = vunpack.c.2.s8 %v78
  %v88 = vunpack.c.3.s8 %v78
  %v89 = vunpack.c.0.s8 %v79
  %v90 = vunpack.c.1.s8 %v79
  %v91 = vunpack.c.2.s8 %v79
  %v92 = vunpack.c.3.s8 %v79
  %v93 = vunpack.c.0.s8 %v80
  %v94 = vunpack.c.1.s8 %v80
  %v95 = vunpack.c.2.s8 %v80
  %v96 = vunpack.c.3.s8 %v80
  %v97 = vcvt.s32.f32 %v81
  %v98 = vcvt.s32.f32 %v82
  %v99 = vcvt.s32.f32 %v83
  %v100 = vcvt.s32.f32 %v84
  %v101 = vcvt.s32.f32 %v85
  %v102 = vcvt.s32.f32 %v86
  %v103 = vcvt.s32.f32 %v87
  %v104 = vcvt.s32.f32 %v88
  %v105 = vcvt.s32.f32 %v89
  %v106 = vcvt.s32.f32 %v90
  %v107 = vcvt.s32.f32 %v91
  %v108 = vcvt.s32.f32 %v92
  %v109 = vcvt.s32.f32 %v93
  %v110 = vcvt.s32.f32 %v94
  %v111 = vcvt.s32.f32 %v95
  %v112 = vcvt.s32.f32 %v96
  %v113 = vpack.c.bf16 %v98, %v97
  %v114 = vpack.c.bf16 %v100, %v99
  %v115 = vpack.c.bf16 %v102, %v101
  %v116 = vpack.c.bf16 %v104, %v103
  %v117 = vpack.c.bf16 %v106, %v105
  %v118 = vpack.c.bf16 %v108, %v107
  %v119 = vpack.c.bf16 %v110, %v109
  %v120 = vpack.c.bf16 %v112, %v111
  %v137 = vunpack.c.l.b16 %v45
  %v138 = vunpack.c.l.b16 %v46
  %v139 = vunpack.c.l.b16 %v47
  %v140 = vunpack.c.l.b16 %v48
  %v141 = vunpack.c.l.b16 %v49
  %v142 = vunpack.c.l.b16 %v50
  %v143 = vunpack.c.l.b16 %v51
  %v144 = vunpack.c.l.b16 %v52
  %v145 = vunpack.c.l.b16 %v53
  %v146 = vunpack.c.l.b16 %v54
  %v147 = vunpack.c.l.b16 %v55
  %v148 = vunpack.c.l.b16 %v56
  %v149 = vunpack.c.l.b16 %v57
  %v150 = vunpack.c.l.b16 %v58
  %v151 = vunpack.c.l.b16 %v59
  %v152 = vunpack.c.l.b16 %v60
  %v153 = vpack.c.b16 %v138, %v137
  %v154 = vpack.c.b16 %v140, %v139
  %v155 = vpack.c.b16 %v142, %v141
  %v156 = vpack.c.b16 %v144, %v143
  %v157 = vpack.c.b16 %v146, %v145
  %v158 = vpack.c.b16 %v148, %v147
  %v159 = vpack.c.b16 %v150, %v149
  %v160 = vpack.c.b16 %v152, %v151
  %169 = vmatpush.bf16.msra.mxu0 %v160
  %170 = vmatpush.bf16.msra.mxu0 %v159
  %171 = vmatpush.bf16.msra.mxu0 %v158
  %172 = vmatpush.bf16.msra.mxu0 %v157
  %173 = vmatpush.bf16.msra.mxu0 %v156
  %174 = vmatpush.bf16.msra.mxu0 %v155
  %175 = vmatpush.bf16.msra.mxu0 %v154
  %176 = vmatpush.bf16.msra.mxu0 %v153
  %177 = vmatmul.bf16.gmra.mxu0 %v113
  %v178 = vpop.f32.mrf.mxu0
  %v179 = vadd.f32 0.0, %v178
  %v180 = vpop.f32.mrf.mxu0
  %v181 = vadd.f32 0.0, %v180
  %182 = vmatmul.bf16.gmra.mxu0 %v114
  %v183 = vpop.f32.mrf.mxu0
  %v184 = vadd.f32 0.0, %v183
  %v185 = vpop.f32.mrf.mxu0
  %v186 = vadd.f32 0.0, %v185
  %187 = vmatmul.bf16.gmra.mxu0 %v115
  %v188 = vpop.f32.mrf.mxu0
  %v189 = vadd.f32 0.0, %v188
  %v190 = vpop.f32.mrf.mxu0
  %v191 = vadd.f32 0.0, %v190
  %192 = vmatmul.bf16.gmra.mxu0 %v116
  %v193 = vpop.f32.mrf.mxu0
  %v194 = vadd.f32 0.0, %v193
  %v195 = vpop.f32.mrf.mxu0
  %v196 = vadd.f32 0.0, %v195
  %197 = vmatmul.bf16.gmra.mxu0 %v117
  %v198 = vpop.f32.mrf.mxu0
  %v199 = vadd.f32 0.0, %v198
  %v200 = vpop.f32.mrf.mxu0
  %v201 = vadd.f32 0.0, %v200
  %202 = vmatmul.bf16.gmra.mxu0 %v118
  %v203 = vpop.f32.mrf.mxu0
  %v204 = vadd.f32 0.0, %v203
  %v205 = vpop.f32.mrf.mxu0
  %v206 = vadd.f32 0.0, %v205
  %207 = vmatmul.bf16.gmra.mxu0 %v119
  %v208 = vpop.f32.mrf.mxu0
  %v209 = vadd.f32 0.0, %v208
  %v210 = vpop.f32.mrf.mxu0
  %v211 = vadd.f32 0.0, %v210
  %212 = vmatmul.bf16.gmra.mxu0 %v120
  %v213 = vpop.f32.mrf.mxu0
  %v214 = vadd.f32 0.0, %v213
  %v215 = vpop.f32.mrf.mxu0
  %v216 = vadd.f32 0.0, %v215
  %217 = vdwg.mxu0
  %v218 = vadd.f32 %v61, %v179
  %v219 = vadd.f32 %v62, %v181
  %v220 = vadd.f32 %v63, %v184
  %v221 = vadd.f32 %v64, %v186
  %v222 = vadd.f32 %v65, %v189
  %v223 = vadd.f32 %v66, %v191
  %v224 = vadd.f32 %v67, %v194
  %v225 = vadd.f32 %v68, %v196
  %v226 = vadd.f32 %v69, %v199
  %v227 = vadd.f32 %v70, %v201
  %v228 = vadd.f32 %v71, %v204
  %v229 = vadd.f32 %v72, %v206
  %v230 = vadd.f32 %v73, %v209
  %v231 = vadd.f32 %v74, %v211
  %v232 = vadd.f32 %v75, %v214
  %v233 = vadd.f32 %v76, %v216
  %234 = vst [vmem:[#allocation2] sm:$0xff] %v218
  %235 = vst [vmem:[#allocation2 + $0x8] sm:$0xff] %v219
  %236 = vst [vmem:[#allocation2 + $0x10] sm:$0xff] %v220
  %237 = vst [vmem:[#allocation2 + $0x18] sm:$0xff] %v221
  %238 = vst [vmem:[#allocation2 + $0x20] sm:$0xff] %v222
  %239 = vst [vmem:[#allocation2 + $0x28] sm:$0xff] %v223
  %240 = vst [vmem:[#allocation2 + $0x30] sm:$0xff] %v224
  %241 = vst [vmem:[#allocation2 + $0x38] sm:$0xff] %v225
  %242 = vst [vmem:[#allocation2 + $0x40] sm:$0xff] %v226
  %243 = vst [vmem:[#allocation2 + $0x48] sm:$0xff] %v227
  %244 = vst [vmem:[#allocation2 + $0x50] sm:$0xff] %v228
  %245 = vst [vmem:[#allocation2 + $0x58] sm:$0xff] %v229
  %246 = vst [vmem:[#allocation2 + $0x60] sm:$0xff] %v230
  %247 = vst [vmem:[#allocation2 + $0x68] sm:$0xff] %v231
  %248 = vst [vmem:[#allocation2 + $0x70] sm:$0xff] %v232
  %249 = vst [vmem:[#allocation2 + $0x78] sm:$0xff] %v233
  // Predicated region
  $region26: #{_rna_encoder_impl.2} parent=0 // pred_check
    %p250 = pneg %p20
  $region27: #{_rna_encoder_impl.2} parent=0 // pred_check_branch
    %252 = sbr.rel (%p250) target = $region29
  $region28: #{_rna_encoder_impl.2} parent=0 // pred_region
    %v253 = vld [vmem:[%s2] sm:$0xff]
    %v254 = vld [vmem:[%s2 + $0x8] sm:$0xff]
    %v255 = vld [vmem:[%s2 + $0x10] sm:$0xff]
    %v256 = vld [vmem:[%s2 + $0x18] sm:$0xff]
    %v257 = vld [vmem:[%s2 + $0x20] sm:$0xff]
    %v258 = vld [vmem:[%s2 + $0x28] sm:$0xff]
    %v259 = vld [vmem:[%s2 + $0x30] sm:$0xff]
    %v260 = vld [vmem:[%s2 + $0x38] sm:$0xff]
    %v261 = vld [vmem:[%s2 + $0x40] sm:$0xff]
    %v262 = vld [vmem:[%s2 + $0x48] sm:$0xff]
    %v263 = vld [vmem:[%s2 + $0x50] sm:$0xff]
    %v264 = vld [vmem:[%s2 + $0x58] sm:$0xff]
    %v265 = vld [vmem:[%s2 + $0x60] sm:$0xff]
    %v266 = vld [vmem:[%s2 + $0x68] sm:$0xff]
    %v267 = vld [vmem:[%s2 + $0x70] sm:$0xff]
    %v268 = vld [vmem:[%s2 + $0x78] sm:$0xff]
    %v269 = vld [vmem:[#allocation2] sm:$0xff]
    %v270 = vld [vmem:[#allocation2 + $0x8] sm:$0xff]
    %v271 = vld [vmem:[#allocation2 + $0x10] sm:$0xff]
    %v272 = vld [vmem:[#allocation2 + $0x18] sm:$0xff]
    %v273 = vld [vmem:[#allocation2 + $0x20] sm:$0xff]
    %v274 = vld [vmem:[#allocation2 + $0x28] sm:$0xff]
    %v275 = vld [vmem:[#allocation2 + $0x30] sm:$0xff]
    %v276 = vld [vmem:[#allocation2 + $0x38] sm:$0xff]
    %v277 = vld [vmem:[#allocation2 + $0x40] sm:$0xff]
    %v278 = vld [vmem:[#allocation2 + $0x48] sm:$0xff]
    %v279 = vld [vmem:[#allocation2 + $0x50] sm:$0xff]
    %v280 = vld [vmem:[#allocation2 + $0x58] sm:$0xff]
    %v281 = vld [vmem:[#allocation2 + $0x60] sm:$0xff]
    %v282 = vld [vmem:[#allocation2 + $0x68] sm:$0xff]
    %v283 = vld [vmem:[#allocation2 + $0x70] sm:$0xff]
    %v284 = vld [vmem:[#allocation2 + $0x78] sm:$0xff]
    %286 = vset.pattern.permute.xlu0 0
    %287 = vperm.xlu0 %286, %v253
    %v288 = vpop.permute.xlu0 %287
    %291 = vset.pattern.permute.xlu0 0
    %292 = vperm.xlu0 %291, %v254
    %v293 = vpop.permute.xlu0 %292
    %296 = vset.pattern.permute.xlu0 0
    %297 = vperm.xlu0 %296, %v255
    %v298 = vpop.permute.xlu0 %297
    %301 = vset.pattern.permute.xlu0 0
    %302 = vperm.xlu0 %301, %v256
    %v303 = vpop.permute.xlu0 %302
    %306 = vset.pattern.permute.xlu0 0
    %307 = vperm.xlu0 %306, %v257
    %v308 = vpop.permute.xlu0 %307
    %311 = vset.pattern.permute.xlu0 0
    %312 = vperm.xlu0 %311, %v258
    %v313 = vpop.permute.xlu0 %312
    %316 = vset.pattern.permute.xlu0 0
    %317 = vperm.xlu0 %316, %v259
    %v318 = vpop.permute.xlu0 %317
    %321 = vset.pattern.permute.xlu0 0
    %322 = vperm.xlu0 %321, %v260
    %v323 = vpop.permute.xlu0 %322
    %326 = vset.pattern.permute.xlu0 0
    %327 = vperm.xlu0 %326, %v261
    %v328 = vpop.permute.xlu0 %327
    %331 = vset.pattern.permute.xlu0 0
    %332 = vperm.xlu0 %331, %v262
    %v333 = vpop.permute.xlu0 %332
    %336 = vset.pattern.permute.xlu0 0
    %337 = vperm.xlu0 %336, %v263
    %v338 = vpop.permute.xlu0 %337
    %341 = vset.pattern.permute.xlu0 0
    %342 = vperm.xlu0 %341, %v264
    %v343 = vpop.permute.xlu0 %342
    %346 = vset.pattern.permute.xlu0 0
    %347 = vperm.xlu0 %346, %v265
    %v348 = vpop.permute.xlu0 %347
    %351 = vset.pattern.permute.xlu0 0
    %352 = vperm.xlu0 %351, %v266
    %v353 = vpop.permute.xlu0 %352
    %356 = vset.pattern.permute.xlu0 0
    %357 = vperm.xlu0 %356, %v267
    %v358 = vpop.permute.xlu0 %357
    %361 = vset.pattern.permute.xlu0 0
    %362 = vperm.xlu0 %361, %v268
    %v363 = vpop.permute.xlu0 %362
    %v365 = vmul.f32 %v269, %v288
    %v366 = vmul.f32 %v270, %v293
    %v367 = vmul.f32 %v271, %v298
    %v368 = vmul.f32 %v272, %v303
    %v369 = vmul.f32 %v273, %v308
    %v370 = vmul.f32 %v274, %v313
    %v371 = vmul.f32 %v275, %v318
    %v372 = vmul.f32 %v276, %v323
    %v373 = vmul.f32 %v277, %v328
    %v374 = vmul.f32 %v278, %v333
    %v375 = vmul.f32 %v279, %v338
    %v376 = vmul.f32 %v280, %v343
    %v377 = vmul.f32 %v281, %v348
    %v378 = vmul.f32 %v282, %v353
    %v379 = vmul.f32 %v283, %v358
    %v380 = vmul.f32 %v284, %v363
    %v381 = vld [vmem:[%s3] sm:$0x1]
    %v383 = vperm.slane %v381, 0
    %v385 = vadd.f32 %v365, %v383
    %v386 = vadd.f32 %v366, %v383
    %v387 = vadd.f32 %v367, %v383
    %v388 = vadd.f32 %v368, %v383
    %v389 = vadd.f32 %v369, %v383
    %v390 = vadd.f32 %v370, %v383
    %v391 = vadd.f32 %v371, %v383
    %v392 = vadd.f32 %v372, %v383
    %v393 = vadd.f32 %v373, %v383
    %v394 = vadd.f32 %v374, %v383
    %v395 = vadd.f32 %v375, %v383
    %v396 = vadd.f32 %v376, %v383
    %v397 = vadd.f32 %v377, %v383
    %v398 = vadd.f32 %v378, %v383
    %v399 = vadd.f32 %v379, %v383
    %v400 = vadd.f32 %v380, %v383
    %v401 = vmax.f32 %v385, 0.0
    %v402 = vmax.f32 %v386, 0.0
    %v403 = vmax.f32 %v387, 0.0
    %v404 = vmax.f32 %v388, 0.0
    %v405 = vmax.f32 %v389, 0.0
    %v406 = vmax.f32 %v390, 0.0
    %v407 = vmax.f32 %v391, 0.0
    %v408 = vmax.f32 %v392, 0.0
    %v409 = vmax.f32 %v393, 0.0
    %v410 = vmax.f32 %v394, 0.0
    %v411 = vmax.f32 %v395, 0.0
    %v412 = vmax.f32 %v396, 0.0
    %v413 = vmax.f32 %v397, 0.0
    %v414 = vmax.f32 %v398, 0.0
    %v415 = vmax.f32 %v399, 0.0
    %v416 = vmax.f32 %v400, 0.0
    %v417 = vpack.c.bf16 %v402, %v401
    %v418 = vpack.c.bf16 %v404, %v403
    %v419 = vpack.c.bf16 %v406, %v405
    %v420 = vpack.c.bf16 %v408, %v407
    %v421 = vpack.c.bf16 %v410, %v409
    %v422 = vpack.c.bf16 %v412, %v411
    %v423 = vpack.c.bf16 %v414, %v413
    %v424 = vpack.c.bf16 %v416, %v415
    %v425 = vld [vmem:[%s4] sm:$0xf]
    %v426 = vld [vmem:[%s4 + $0x4] sm:$0xf]
    %v427 = vld [vmem:[%s4 + $0x8] sm:$0xf]
    %v428 = vld [vmem:[%s4 + $0xc] sm:$0xf]
    %v429 = vld [vmem:[%s4 + $0x10] sm:$0xf]
    %v430 = vld [vmem:[%s4 + $0x14] sm:$0xf]
    %v431 = vld [vmem:[%s4 + $0x18] sm:$0xf]
    %v432 = vld [vmem:[%s4 + $0x1c] sm:$0xf]
    %v433 = vld [vmem:[%s4 + $0x20] sm:$0xf]
    %v434 = vld [vmem:[%s4 + $0x24] sm:$0xf]
    %v435 = vld [vmem:[%s4 + $0x28] sm:$0xf]
    %v436 = vld [vmem:[%s4 + $0x2c] sm:$0xf]
    %v437 = vld [vmem:[%s4 + $0x30] sm:$0xf]
    %v438 = vld [vmem:[%s4 + $0x34] sm:$0xf]
    %v439 = vld [vmem:[%s4 + $0x38] sm:$0xf]
    %v440 = vld [vmem:[%s4 + $0x3c] sm:$0xf]
    %v457 = vunpack.c.l.b16 %v425
    %v458 = vunpack.c.l.b16 %v426
    %v459 = vunpack.c.l.b16 %v427
    %v460 = vunpack.c.l.b16 %v428
    %v461 = vunpack.c.l.b16 %v429
    %v462 = vunpack.c.l.b16 %v430
    %v463 = vunpack.c.l.b16 %v431
    %v464 = vunpack.c.l.b16 %v432
    %v465 = vunpack.c.l.b16 %v433
    %v466 = vunpack.c.l.b16 %v434
    %v467 = vunpack.c.l.b16 %v435
    %v468 = vunpack.c.l.b16 %v436
    %v469 = vunpack.c.l.b16 %v437
    %v470 = vunpack.c.l.b16 %v438
    %v471 = vunpack.c.l.b16 %v439
    %v472 = vunpack.c.l.b16 %v440
    %v473 = vpack.c.b16 %v458, %v457
    %v474 = vpack.c.b16 %v460, %v459
    %v475 = vpack.c.b16 %v462, %v461
    %v476 = vpack.c.b16 %v464, %v463
    %v477 = vpack.c.b16 %v466, %v465
    %v478 = vpack.c.b16 %v468, %v467
    %v479 = vpack.c.b16 %v470, %v469
    %v480 = vpack.c.b16 %v472, %v471
    %489 = vmatpush.bf16.msra.mxu0 %v480
    %490 = vmatpush.bf16.msra.mxu0 %v479
    %491 = vmatpush.bf16.msra.mxu0 %v478
    %492 = vmatpush.bf16.msra.mxu0 %v477
    %493 = vmatpush.bf16.msra.mxu0 %v476
    %494 = vmatpush.bf16.msra.mxu0 %v475
    %495 = vmatpush.bf16.msra.mxu0 %v474
    %496 = vmatpush.bf16.msra.mxu0 %v473
    %497 = vmatmul.bf16.gmra.mxu0 %v417
    %v498 = vpop.f32.mrf.mxu0
    %v499 = vadd.f32 0.0, %v498
    %v500 = vpop.f32.mrf.mxu0
    %v501 = vadd.f32 0.0, %v500
    %502 = vmatmul.bf16.gmra.mxu0 %v418
    %v503 = vpop.f32.mrf.mxu0
    %v504 = vadd.f32 0.0, %v503
    %v505 = vpop.f32.mrf.mxu0
    %v506 = vadd.f32 0.0, %v505
    %507 = vmatmul.bf16.gmra.mxu0 %v419
    %v508 = vpop.f32.mrf.mxu0
    %v509 = vadd.f32 0.0, %v508
    %v510 = vpop.f32.mrf.mxu0
    %v511 = vadd.f32 0.0, %v510
    %512 = vmatmul.bf16.gmra.mxu0 %v420
    %v513 = vpop.f32.mrf.mxu0
    %v514 = vadd.f32 0.0, %v513
    %v515 = vpop.f32.mrf.mxu0
    %v516 = vadd.f32 0.0, %v515
    %517 = vmatmul.bf16.gmra.mxu0 %v421
    %v518 = vpop.f32.mrf.mxu0
    %v519 = vadd.f32 0.0, %v518
    %v520 = vpop.f32.mrf.mxu0
    %v521 = vadd.f32 0.0, %v520
    %522 = vmatmul.bf16.gmra.mxu0 %v422
    %v523 = vpop.f32.mrf.mxu0
    %v524 = vadd.f32 0.0, %v523
    %v525 = vpop.f32.mrf.mxu0
    %v526 = vadd.f32 0.0, %v525
    %527 = vmatmul.bf16.gmra.mxu0 %v423
    %v528 = vpop.f32.mrf.mxu0
    %v529 = vadd.f32 0.0, %v528
    %v530 = vpop.f32.mrf.mxu0
    %v531 = vadd.f32 0.0, %v530
    %532 = vmatmul.bf16.gmra.mxu0 %v424
    %v533 = vpop.f32.mrf.mxu0
    %v534 = vadd.f32 0.0, %v533
    %v535 = vpop.f32.mrf.mxu0
    %v536 = vadd.f32 0.0, %v535
    %537 = vdwg.mxu0
    %v538 = vmul.f32 %v499, %v288
    %v539 = vmul.f32 %v501, %v293
    %v540 = vmul.f32 %v504, %v298
    %v541 = vmul.f32 %v506, %v303
    %v542 = vmul.f32 %v509, %v308
    %v543 = vmul.f32 %v511, %v313
    %v544 = vmul.f32 %v514, %v318
    %v545 = vmul.f32 %v516, %v323
    %v546 = vmul.f32 %v519, %v328
    %v547 = vmul.f32 %v521, %v333
    %v548 = vmul.f32 %v524, %v338
    %v549 = vmul.f32 %v526, %v343
    %v550 = vmul.f32 %v529, %v348
    %v551 = vmul.f32 %v531, %v353
    %v552 = vmul.f32 %v534, %v358
    %v553 = vmul.f32 %v536, %v363
    %v554 = vpack.c.bf16 %v538, %v538
    %v555 = vpack.c.bf16 %v539, %v539
    %v556 = vpack.c.bf16 %v540, %v540
    %v557 = vpack.c.bf16 %v541, %v541
    %v558 = vpack.c.bf16 %v542, %v542
    %v559 = vpack.c.bf16 %v543, %v543
    %v560 = vpack.c.bf16 %v544, %v544
    %v561 = vpack.c.bf16 %v545, %v545
    %v562 = vpack.c.bf16 %v546, %v546
    %v563 = vpack.c.bf16 %v547, %v547
    %v564 = vpack.c.bf16 %v548, %v548
    %v565 = vpack.c.bf16 %v549, %v549
    %v566 = vpack.c.bf16 %v550, %v550
    %v567 = vpack.c.bf16 %v551, %v551
    %v568 = vpack.c.bf16 %v552, %v552
    %v569 = vpack.c.bf16 %v553, %v553
    %570 = vst [vmem:[%s5] sm:$0xf] %v554
    %571 = vst [vmem:[%s5 + $0x4] sm:$0xf] %v555
    %572 = vst [vmem:[%s5 + $0x8] sm:$0xf] %v556
    %573 = vst [vmem:[%s5 + $0xc] sm:$0xf] %v557
    %574 = vst [vmem:[%s5 + $0x10] sm:$0xf] %v558
    %575 = vst [vmem:[%s5 + $0x14] sm:$0xf] %v559
    %576 = vst [vmem:[%s5 + $0x18] sm:$0xf] %v560
    %577 = vst [vmem:[%s5 + $0x1c] sm:$0xf] %v561
    %578 = vst [vmem:[%s5 + $0x20] sm:$0xf] %v562
    %579 = vst [vmem:[%s5 + $0x24] sm:$0xf] %v563
    %580 = vst [vmem:[%s5 + $0x28] sm:$0xf] %v564
    %581 = vst [vmem:[%s5 + $0x2c] sm:$0xf] %v565
    %582 = vst [vmem:[%s5 + $0x30] sm:$0xf] %v566
    %583 = vst [vmem:[%s5 + $0x34] sm:$0xf] %v567
    %584 = vst [vmem:[%s5 + $0x38] sm:$0xf] %v568
    %585 = vst [vmem:[%s5 + $0x3c] sm:$0xf] %v569
  $region29: #{_rna_encoder_impl.2} parent=0 // pred_fallthru
    _
  // Predicated region
  $region30: #{_rna_encoder_impl.2} parent=0 // pred_check
    _
  $region31: #{_rna_encoder_impl.2} parent=0 // pred_check_branch
    %587 = sbr.rel (0) target = $region33
  $region32: #{_rna_encoder_impl.2} parent=0 // pred_region
    _
  $region33: #{_rna_encoder_impl.2} parent=0 // pred_fallthru
    _
  // Predicated region
  $region34: #{_rna_encoder_impl.2} parent=0 // pred_check
    _
  $region35: #{_rna_encoder_impl.2} parent=0 // pred_check_branch
    %589 = sbr.rel (0) target = $region37
  $region36: #{_rna_encoder_impl.2} parent=0 // pred_region
    _
  $region37: #{_rna_encoder_impl.2} parent=0 // pred_fallthru
    _

// kernel: _rna_encoder_impl.3
$region0: #{_rna_encoder_impl.3}
  #allocation0 [shape = 'u32[]', space=smem, size = 0x4, offset = 0x4, fixed_abs, tag = 'smem constant byte address 0x4 - core index']
  #allocation1 [shape = 'u32[72,128]{1,0:T(1,128)}', space=vmem, size = 0x9000, scoped, tag = 'internal scratch']
  #allocation2 [shape = 'f32[128,128]{1,0:T(8,128)}', space=vmem, size = 0x10000, scoped, tag = 'scratch operand']
  %s0 = inlined_call_operand.vmem [shape: s8[128,128], index: 0, kind: input, shape index: {}]
  %s1 = inlined_call_operand.vmem [shape: bf16[128,128], index: 1, kind: input, shape index: {}]
  %s2 = inlined_call_operand.vmem [shape: f32[128,1], index: 2, kind: input, shape index: {}]
  %s3 = inlined_call_operand.vmem [shape: f32[1,128], index: 3, kind: input, shape index: {}]
  %s4 = inlined_call_operand.vmem [shape: f32[128,128], index: 4, kind: output, shape index: {}]
  %s5 = sld [smem:[#allocation0]]
  $region34: #{_rna_encoder_impl.3} parent=0
    _
  %s7 = ssub.s32 1, %s5
  %s8 = scalar_select 0, %s7, %s5
  // Predicated region
  $region2: #{_rna_encoder_impl.3} parent=0 // pred_check
    _
  $region3: #{_rna_encoder_impl.3} parent=0 // pred_check_branch
    %10 = sbr.rel (0) target = $region5
  $region4: #{_rna_encoder_impl.3} parent=0 // pred_region
    _
  $region5: #{_rna_encoder_impl.3} parent=0 // pred_fallthru
    _
  // Predicated region
  $region6: #{_rna_encoder_impl.3} parent=0 // pred_check
    _
  $region7: #{_rna_encoder_impl.3} parent=0 // pred_check_branch
    %12 = sbr.rel (0) target = $region9
  $region8: #{_rna_encoder_impl.3} parent=0 // pred_region
    _
  $region9: #{_rna_encoder_impl.3} parent=0 // pred_fallthru
    _
  // Predicated region
  $region10: #{_rna_encoder_impl.3} parent=0 // pred_check
    _
  $region11: #{_rna_encoder_impl.3} parent=0 // pred_check_branch
    %14 = sbr.rel (0) target = $region13
  $region12: #{_rna_encoder_impl.3} parent=0 // pred_region
    _
  $region13: #{_rna_encoder_impl.3} parent=0 // pred_fallthru
    _
  // Predicated region
  $region14: #{_rna_encoder_impl.3} parent=0 // pred_check
    _
  $region15: #{_rna_encoder_impl.3} parent=0 // pred_check_branch
    %16 = sbr.rel (0) target = $region17
  $region16: #{_rna_encoder_impl.3} parent=0 // pred_region
    _
  $region17: #{_rna_encoder_impl.3} parent=0 // pred_fallthru
    _
  %p17 = scmp.eq.s32.totalorder 0, 0
  // Predicated region
  $region18: #{_rna_encoder_impl.3} parent=0 // pred_check
    %p18 = pneg %p17
  $region19: #{_rna_encoder_impl.3} parent=0 // pred_check_branch
    %20 = sbr.rel (%p18) target = $region21
  $region20: #{_rna_encoder_impl.3} parent=0 // pred_region
    %21 = vst [vmem:[#allocation2] sm:$0xff] 0.0
    %22 = vst [vmem:[#allocation2 + $0x8] sm:$0xff] 0.0
    %23 = vst [vmem:[#allocation2 + $0x10] sm:$0xff] 0.0
    %24 = vst [vmem:[#allocation2 + $0x18] sm:$0xff] 0.0
    %25 = vst [vmem:[#allocation2 + $0x20] sm:$0xff] 0.0
    %26 = vst [vmem:[#allocation2 + $0x28] sm:$0xff] 0.0
    %27 = vst [vmem:[#allocation2 + $0x30] sm:$0xff] 0.0
    %28 = vst [vmem:[#allocation2 + $0x38] sm:$0xff] 0.0
    %29 = vst [vmem:[#allocation2 + $0x40] sm:$0xff] 0.0
    %30 = vst [vmem:[#allocation2 + $0x48] sm:$0xff] 0.0
    %31 = vst [vmem:[#allocation2 + $0x50] sm:$0xff] 0.0
    %32 = vst [vmem:[#allocation2 + $0x58] sm:$0xff] 0.0
    %33 = vst [vmem:[#allocation2 + $0x60] sm:$0xff] 0.0
    %34 = vst [vmem:[#allocation2 + $0x68] sm:$0xff] 0.0
    %35 = vst [vmem:[#allocation2 + $0x70] sm:$0xff] 0.0
    %36 = vst [vmem:[#allocation2 + $0x78] sm:$0xff] 0.0
  $region21: #{_rna_encoder_impl.3} parent=0 // pred_fallthru
    _
  %s37 = smul.u32 0, 128
  %s38 = sshra.s32 %s37, 3
  %s39 = sand.u32 %s37, 7
  %s40 = smul.addr %s38, 4
  %s41 = scalar_lea.vmem %s1, %s40
  %v42 = vld [vmem:[%s41] sm:$0xf]
  %v43 = vld [vmem:[%s41 + $0x4] sm:$0xf]
  %v44 = vld [vmem:[%s41 + $0x8] sm:$0xf]
  %v45 = vld [vmem:[%s41 + $0xc] sm:$0xf]
  %v46 = vld [vmem:[%s41 + $0x10] sm:$0xf]
  %v47 = vld [vmem:[%s41 + $0x14] sm:$0xf]
  %v48 = vld [vmem:[%s41 + $0x18] sm:$0xf]
  %v49 = vld [vmem:[%s41 + $0x1c] sm:$0xf]
  %v50 = vld [vmem:[%s41 + $0x20] sm:$0xf]
  %v51 = vld [vmem:[%s41 + $0x24] sm:$0xf]
  %v52 = vld [vmem:[%s41 + $0x28] sm:$0xf]
  %v53 = vld [vmem:[%s41 + $0x2c] sm:$0xf]
  %v54 = vld [vmem:[%s41 + $0x30] sm:$0xf]
  %v55 = vld [vmem:[%s41 + $0x34] sm:$0xf]
  %v56 = vld [vmem:[%s41 + $0x38] sm:$0xf]
  %v57 = vld [vmem:[%s41 + $0x3c] sm:$0xf]
  %v58 = vld [vmem:[#allocation2] sm:$0xff]
  %v59 = vld [vmem:[#allocation2 + $0x8] sm:$0xff]
  %v60 = vld [vmem:[#allocation2 + $0x10] sm:$0xff]
  %v61 = vld [vmem:[#allocation2 + $0x18] sm:$0xff]
  %v62 = vld [vmem:[#allocation2 + $0x20] sm:$0xff]
  %v63 = vld [vmem:[#allocation2 + $0x28] sm:$0xff]
  %v64 = vld [vmem:[#allocation2 + $0x30] sm:$0xff]
  %v65 = vld [vmem:[#allocation2 + $0x38] sm:$0xff]
  %v66 = vld [vmem:[#allocation2 + $0x40] sm:$0xff]
  %v67 = vld [vmem:[#allocation2 + $0x48] sm:$0xff]
  %v68 = vld [vmem:[#allocation2 + $0x50] sm:$0xff]
  %v69 = vld [vmem:[#allocation2 + $0x58] sm:$0xff]
  %v70 = vld [vmem:[#allocation2 + $0x60] sm:$0xff]
  %v71 = vld [vmem:[#allocation2 + $0x68] sm:$0xff]
  %v72 = vld [vmem:[#allocation2 + $0x70] sm:$0xff]
  %v73 = vld [vmem:[#allocation2 + $0x78] sm:$0xff]
  %v74 = vld [vmem:[%s0] sm:$0xff]
  %v75 = vld [vmem:[%s0 + $0x8] sm:$0xff]
  %v76 = vld [vmem:[%s0 + $0x10] sm:$0xff]
  %v77 = vld [vmem:[%s0 + $0x18] sm:$0xff]
  %v78 = vunpack.c.0.s8 %v74
  %v79 = vunpack.c.1.s8 %v74
  %v80 = vunpack.c.2.s8 %v74
  %v81 = vunpack.c.3.s8 %v74
  %v82 = vunpack.c.0.s8 %v75
  %v83 = vunpack.c.1.s8 %v75
  %v84 = vunpack.c.2.s8 %v75
  %v85 = vunpack.c.3.s8 %v75
  %v86 = vunpack.c.0.s8 %v76
  %v87 = vunpack.c.1.s8 %v76
  %v88 = vunpack.c.2.s8 %v76
  %v89 = vunpack.c.3.s8 %v76
  %v90 = vunpack.c.0.s8 %v77
  %v91 = vunpack.c.1.s8 %v77
  %v92 = vunpack.c.2.s8 %v77
  %v93 = vunpack.c.3.s8 %v77
  %v94 = vcvt.s32.f32 %v78
  %v95 = vcvt.s32.f32 %v79
  %v96 = vcvt.s32.f32 %v80
  %v97 = vcvt.s32.f32 %v81
  %v98 = vcvt.s32.f32 %v82
  %v99 = vcvt.s32.f32 %v83
  %v100 = vcvt.s32.f32 %v84
  %v101 = vcvt.s32.f32 %v85
  %v102 = vcvt.s32.f32 %v86
  %v103 = vcvt.s32.f32 %v87
  %v104 = vcvt.s32.f32 %v88
  %v105 = vcvt.s32.f32 %v89
  %v106 = vcvt.s32.f32 %v90
  %v107 = vcvt.s32.f32 %v91
  %v108 = vcvt.s32.f32 %v92
  %v109 = vcvt.s32.f32 %v93
  %v110 = vpack.c.bf16 %v95, %v94
  %v111 = vpack.c.bf16 %v97, %v96
  %v112 = vpack.c.bf16 %v99, %v98
  %v113 = vpack.c.bf16 %v101, %v100
  %v114 = vpack.c.bf16 %v103, %v102
  %v115 = vpack.c.bf16 %v105, %v104
  %v116 = vpack.c.bf16 %v107, %v106
  %v117 = vpack.c.bf16 %v109, %v108
  %v134 = vunpack.c.l.b16 %v42
  %v135 = vunpack.c.l.b16 %v43
  %v136 = vunpack.c.l.b16 %v44
  %v137 = vunpack.c.l.b16 %v45
  %v138 = vunpack.c.l.b16 %v46
  %v139 = vunpack.c.l.b16 %v47
  %v140 = vunpack.c.l.b16 %v48
  %v141 = vunpack.c.l.b16 %v49
  %v142 = vunpack.c.l.b16 %v50
  %v143 = vunpack.c.l.b16 %v51
  %v144 = vunpack.c.l.b16 %v52
  %v145 = vunpack.c.l.b16 %v53
  %v146 = vunpack.c.l.b16 %v54
  %v147 = vunpack.c.l.b16 %v55
  %v148 = vunpack.c.l.b16 %v56
  %v149 = vunpack.c.l.b16 %v57
  %v150 = vpack.c.b16 %v135, %v134
  %v151 = vpack.c.b16 %v137, %v136
  %v152 = vpack.c.b16 %v139, %v138
  %v153 = vpack.c.b16 %v141, %v140
  %v154 = vpack.c.b16 %v143, %v142
  %v155 = vpack.c.b16 %v145, %v144
  %v156 = vpack.c.b16 %v147, %v146
  %v157 = vpack.c.b16 %v149, %v148
  %166 = vmatpush.bf16.msra.mxu0 %v157
  %167 = vmatpush.bf16.msra.mxu0 %v156
  %168 = vmatpush.bf16.msra.mxu0 %v155
  %169 = vmatpush.bf16.msra.mxu0 %v154
  %170 = vmatpush.bf16.msra.mxu0 %v153
  %171 = vmatpush.bf16.msra.mxu0 %v152
  %172 = vmatpush.bf16.msra.mxu0 %v151
  %173 = vmatpush.bf16.msra.mxu0 %v150
  %174 = vmatmul.bf16.gmra.mxu0 %v110
  %v175 = vpop.f32.mrf.mxu0
  %v176 = vadd.f32 0.0, %v175
  %v177 = vpop.f32.mrf.mxu0
  %v178 = vadd.f32 0.0, %v177
  %179 = vmatmul.bf16.gmra.mxu0 %v111
  %v180 = vpop.f32.mrf.mxu0
  %v181 = vadd.f32 0.0, %v180
  %v182 = vpop.f32.mrf.mxu0
  %v183 = vadd.f32 0.0, %v182
  %184 = vmatmul.bf16.gmra.mxu0 %v112
  %v185 = vpop.f32.mrf.mxu0
  %v186 = vadd.f32 0.0, %v185
  %v187 = vpop.f32.mrf.mxu0
  %v188 = vadd.f32 0.0, %v187
  %189 = vmatmul.bf16.gmra.mxu0 %v113
  %v190 = vpop.f32.mrf.mxu0
  %v191 = vadd.f32 0.0, %v190
  %v192 = vpop.f32.mrf.mxu0
  %v193 = vadd.f32 0.0, %v192
  %194 = vmatmul.bf16.gmra.mxu0 %v114
  %v195 = vpop.f32.mrf.mxu0
  %v196 = vadd.f32 0.0, %v195
  %v197 = vpop.f32.mrf.mxu0
  %v198 = vadd.f32 0.0, %v197
  %199 = vmatmul.bf16.gmra.mxu0 %v115
  %v200 = vpop.f32.mrf.mxu0
  %v201 = vadd.f32 0.0, %v200
  %v202 = vpop.f32.mrf.mxu0
  %v203 = vadd.f32 0.0, %v202
  %204 = vmatmul.bf16.gmra.mxu0 %v116
  %v205 = vpop.f32.mrf.mxu0
  %v206 = vadd.f32 0.0, %v205
  %v207 = vpop.f32.mrf.mxu0
  %v208 = vadd.f32 0.0, %v207
  %209 = vmatmul.bf16.gmra.mxu0 %v117
  %v210 = vpop.f32.mrf.mxu0
  %v211 = vadd.f32 0.0, %v210
  %v212 = vpop.f32.mrf.mxu0
  %v213 = vadd.f32 0.0, %v212
  %214 = vdwg.mxu0
  %v215 = vadd.f32 %v58, %v176
  %v216 = vadd.f32 %v59, %v178
  %v217 = vadd.f32 %v60, %v181
  %v218 = vadd.f32 %v61, %v183
  %v219 = vadd.f32 %v62, %v186
  %v220 = vadd.f32 %v63, %v188
  %v221 = vadd.f32 %v64, %v191
  %v222 = vadd.f32 %v65, %v193
  %v223 = vadd.f32 %v66, %v196
  %v224 = vadd.f32 %v67, %v198
  %v225 = vadd.f32 %v68, %v201
  %v226 = vadd.f32 %v69, %v203
  %v227 = vadd.f32 %v70, %v206
  %v228 = vadd.f32 %v71, %v208
  %v229 = vadd.f32 %v72, %v211
  %v230 = vadd.f32 %v73, %v213
  %231 = vst [vmem:[#allocation2] sm:$0xff] %v215
  %232 = vst [vmem:[#allocation2 + $0x8] sm:$0xff] %v216
  %233 = vst [vmem:[#allocation2 + $0x10] sm:$0xff] %v217
  %234 = vst [vmem:[#allocation2 + $0x18] sm:$0xff] %v218
  %235 = vst [vmem:[#allocation2 + $0x20] sm:$0xff] %v219
  %236 = vst [vmem:[#allocation2 + $0x28] sm:$0xff] %v220
  %237 = vst [vmem:[#allocation2 + $0x30] sm:$0xff] %v221
  %238 = vst [vmem:[#allocation2 + $0x38] sm:$0xff] %v222
  %239 = vst [vmem:[#allocation2 + $0x40] sm:$0xff] %v223
  %240 = vst [vmem:[#allocation2 + $0x48] sm:$0xff] %v224
  %241 = vst [vmem:[#allocation2 + $0x50] sm:$0xff] %v225
  %242 = vst [vmem:[#allocation2 + $0x58] sm:$0xff] %v226
  %243 = vst [vmem:[#allocation2 + $0x60] sm:$0xff] %v227
  %244 = vst [vmem:[#allocation2 + $0x68] sm:$0xff] %v228
  %245 = vst [vmem:[#allocation2 + $0x70] sm:$0xff] %v229
  %246 = vst [vmem:[#allocation2 + $0x78] sm:$0xff] %v230
  // Predicated region
  $region22: #{_rna_encoder_impl.3} parent=0 // pred_check
    %p247 = pneg %p17
  $region23: #{_rna_encoder_impl.3} parent=0 // pred_check_branch
    %249 = sbr.rel (%p247) target = $region25
  $region24: #{_rna_encoder_impl.3} parent=0 // pred_region
    %v250 = vld [vmem:[#allocation2] sm:$0xff]
    %v251 = vld [vmem:[#allocation2 + $0x8] sm:$0xff]
    %v252 = vld [vmem:[#allocation2 + $0x10] sm:$0xff]
    %v253 = vld [vmem:[#allocation2 + $0x18] sm:$0xff]
    %v254 = vld [vmem:[#allocation2 + $0x20] sm:$0xff]
    %v255 = vld [vmem:[#allocation2 + $0x28] sm:$0xff]
    %v256 = vld [vmem:[#allocation2 + $0x30] sm:$0xff]
    %v257 = vld [vmem:[#allocation2 + $0x38] sm:$0xff]
    %v258 = vld [vmem:[#allocation2 + $0x40] sm:$0xff]
    %v259 = vld [vmem:[#allocation2 + $0x48] sm:$0xff]
    %v260 = vld [vmem:[#allocation2 + $0x50] sm:$0xff]
    %v261 = vld [vmem:[#allocation2 + $0x58] sm:$0xff]
    %v262 = vld [vmem:[#allocation2 + $0x60] sm:$0xff]
    %v263 = vld [vmem:[#allocation2 + $0x68] sm:$0xff]
    %v264 = vld [vmem:[#allocation2 + $0x70] sm:$0xff]
    %v265 = vld [vmem:[#allocation2 + $0x78] sm:$0xff]
    %v266 = vld [vmem:[%s2] sm:$0xff]
    %v267 = vld [vmem:[%s2 + $0x8] sm:$0xff]
    %v268 = vld [vmem:[%s2 + $0x10] sm:$0xff]
    %v269 = vld [vmem:[%s2 + $0x18] sm:$0xff]
    %v270 = vld [vmem:[%s2 + $0x20] sm:$0xff]
    %v271 = vld [vmem:[%s2 + $0x28] sm:$0xff]
    %v272 = vld [vmem:[%s2 + $0x30] sm:$0xff]
    %v273 = vld [vmem:[%s2 + $0x38] sm:$0xff]
    %v274 = vld [vmem:[%s2 + $0x40] sm:$0xff]
    %v275 = vld [vmem:[%s2 + $0x48] sm:$0xff]
    %v276 = vld [vmem:[%s2 + $0x50] sm:$0xff]
    %v277 = vld [vmem:[%s2 + $0x58] sm:$0xff]
    %v278 = vld [vmem:[%s2 + $0x60] sm:$0xff]
    %v279 = vld [vmem:[%s2 + $0x68] sm:$0xff]
    %v280 = vld [vmem:[%s2 + $0x70] sm:$0xff]
    %v281 = vld [vmem:[%s2 + $0x78] sm:$0xff]
    %283 = vset.pattern.permute.xlu0 0
    %284 = vperm.xlu0 %283, %v266
    %v285 = vpop.permute.xlu0 %284
    %288 = vset.pattern.permute.xlu0 0
    %289 = vperm.xlu0 %288, %v267
    %v290 = vpop.permute.xlu0 %289
    %293 = vset.pattern.permute.xlu0 0
    %294 = vperm.xlu0 %293, %v268
    %v295 = vpop.permute.xlu0 %294
    %298 = vset.pattern.permute.xlu0 0
    %299 = vperm.xlu0 %298, %v269
    %v300 = vpop.permute.xlu0 %299
    %303 = vset.pattern.permute.xlu0 0
    %304 = vperm.xlu0 %303, %v270
    %v305 = vpop.permute.xlu0 %304
    %308 = vset.pattern.permute.xlu0 0
    %309 = vperm.xlu0 %308, %v271
    %v310 = vpop.permute.xlu0 %309
    %313 = vset.pattern.permute.xlu0 0
    %314 = vperm.xlu0 %313, %v272
    %v315 = vpop.permute.xlu0 %314
    %318 = vset.pattern.permute.xlu0 0
    %319 = vperm.xlu0 %318, %v273
    %v320 = vpop.permute.xlu0 %319
    %323 = vset.pattern.permute.xlu0 0
    %324 = vperm.xlu0 %323, %v274
    %v325 = vpop.permute.xlu0 %324
    %328 = vset.pattern.permute.xlu0 0
    %329 = vperm.xlu0 %328, %v275
    %v330 = vpop.permute.xlu0 %329
    %333 = vset.pattern.permute.xlu0 0
    %334 = vperm.xlu0 %333, %v276
    %v335 = vpop.permute.xlu0 %334
    %338 = vset.pattern.permute.xlu0 0
    %339 = vperm.xlu0 %338, %v277
    %v340 = vpop.permute.xlu0 %339
    %343 = vset.pattern.permute.xlu0 0
    %344 = vperm.xlu0 %343, %v278
    %v345 = vpop.permute.xlu0 %344
    %348 = vset.pattern.permute.xlu0 0
    %349 = vperm.xlu0 %348, %v279
    %v350 = vpop.permute.xlu0 %349
    %353 = vset.pattern.permute.xlu0 0
    %354 = vperm.xlu0 %353, %v280
    %v355 = vpop.permute.xlu0 %354
    %358 = vset.pattern.permute.xlu0 0
    %359 = vperm.xlu0 %358, %v281
    %v360 = vpop.permute.xlu0 %359
    %v362 = vmul.f32 %v250, %v285
    %v363 = vmul.f32 %v251, %v290
    %v364 = vmul.f32 %v252, %v295
    %v365 = vmul.f32 %v253, %v300
    %v366 = vmul.f32 %v254, %v305
    %v367 = vmul.f32 %v255, %v310
    %v368 = vmul.f32 %v256, %v315
    %v369 = vmul.f32 %v257, %v320
    %v370 = vmul.f32 %v258, %v325
    %v371 = vmul.f32 %v259, %v330
    %v372 = vmul.f32 %v260, %v335
    %v373 = vmul.f32 %v261, %v340
    %v374 = vmul.f32 %v262, %v345
    %v375 = vmul.f32 %v263, %v350
    %v376 = vmul.f32 %v264, %v355
    %v377 = vmul.f32 %v265, %v360
    %v378 = vld [vmem:[%s3] sm:$0x1]
    %v380 = vperm.slane %v378, 0
    %v382 = vadd.f32 %v362, %v380
    %v383 = vadd.f32 %v363, %v380
    %v384 = vadd.f32 %v364, %v380
    %v385 = vadd.f32 %v365, %v380
    %v386 = vadd.f32 %v366, %v380
    %v387 = vadd.f32 %v367, %v380
    %v388 = vadd.f32 %v368, %v380
    %v389 = vadd.f32 %v369, %v380
    %v390 = vadd.f32 %v370, %v380
    %v391 = vadd.f32 %v371, %v380
    %v392 = vadd.f32 %v372, %v380
    %v393 = vadd.f32 %v373, %v380
    %v394 = vadd.f32 %v374, %v380
    %v395 = vadd.f32 %v375, %v380
    %v396 = vadd.f32 %v376, %v380
    %v397 = vadd.f32 %v377, %v380
    %398 = vst [vmem:[%s4] sm:$0xff] %v382
    %399 = vst [vmem:[%s4 + $0x8] sm:$0xff] %v383
    %400 = vst [vmem:[%s4 + $0x10] sm:$0xff] %v384
    %401 = vst [vmem:[%s4 + $0x18] sm:$0xff] %v385
    %402 = vst [vmem:[%s4 + $0x20] sm:$0xff] %v386
    %403 = vst [vmem:[%s4 + $0x28] sm:$0xff] %v387
    %404 = vst [vmem:[%s4 + $0x30] sm:$0xff] %v388
    %405 = vst [vmem:[%s4 + $0x38] sm:$0xff] %v389
    %406 = vst [vmem:[%s4 + $0x40] sm:$0xff] %v390
    %407 = vst [vmem:[%s4 + $0x48] sm:$0xff] %v391
    %408 = vst [vmem:[%s4 + $0x50] sm:$0xff] %v392
    %409 = vst [vmem:[%s4 + $0x58] sm:$0xff] %v393
    %410 = vst [vmem:[%s4 + $0x60] sm:$0xff] %v394
    %411 = vst [vmem:[%s4 + $0x68] sm:$0xff] %v395
    %412 = vst [vmem:[%s4 + $0x70] sm:$0xff] %v396
    %413 = vst [vmem:[%s4 + $0x78] sm:$0xff] %v397
  $region25: #{_rna_encoder_impl.3} parent=0 // pred_fallthru
    _
  // Predicated region
  $region26: #{_rna_encoder_impl.3} parent=0 // pred_check
    _
  $region27: #{_rna_encoder_impl.3} parent=0 // pred_check_branch
    %415 = sbr.rel (0) target = $region29
  $region28: #{_rna_encoder_impl.3} parent=0 // pred_region
    _
  $region29: #{_rna_encoder_impl.3} parent=0 // pred_fallthru
    _
  // Predicated region
  $region30: #{_rna_encoder_impl.3} parent=0 // pred_check
    _
  $region31: #{_rna_encoder_impl.3} parent=0 // pred_check_branch
    %417 = sbr.rel (0) target = $region33
  $region32: #{_rna_encoder_impl.3} parent=0 // pred_region
    _
  $region33: #{_rna_encoder_impl.3} parent=0 // pred_fallthru
    _

</llo_original>
